<compile_context>
chip_gen: v7x
topology: tpu7x:2x2x1
jax: 0.10.0
libtpu: 0.0.40
codegen_flags: <defaults>
</compile_context>

<pallas_src>
import math

import jax
import jax.numpy as jnp
from jax.experimental import pallas as pl
from jax.experimental.pallas import tpu as pltpu


# --------------------------------------------------------------------------- #
# Helpers
# --------------------------------------------------------------------------- #
def _round_up(x: int, m: int) -> int:
    return ((x + m - 1) // m) * m


def _cdiv(a: int, b: int) -> int:
    return (a + b - 1) // b


def _vmem_capacity_bytes() -> int:
    """Per-core VMEM capacity; conservative 64 MiB fallback (v7x) if unknown."""
    try:
        info = pltpu.get_tpu_info()
        for name in ("vmem_capacity_bytes", "vmem_size_bytes", "vmem_bytes"):
            cap = getattr(info, name, None)
            if cap:
                return int(cap)
    except Exception:
        pass
    return 64 * 1024 * 1024


def _pad_cast_2d(a, rows: int, cols: int, dtype):
    """Cast first (halves the pad-copy bytes), then zero-pad; skip no-ops."""
    if a.dtype != dtype:
        a = a.astype(dtype)
    pr, pc = rows - a.shape[0], cols - a.shape[1]
    if pr or pc:
        a = jnp.pad(a, ((0, pr), (0, pc)))
    return a


def _pick_tile_n(n: int, desired: int = 512) -> int:
    """Row tile: >=2 grid steps when possible (v7x dual-TC) and low row padding."""
    n8 = _round_up(n, 8)
    num_tiles = max(2, _cdiv(n8, desired))
    tile = _round_up(_cdiv(n8, num_tiles), 8)
    return max(8, min(tile, n8))


def _fit_tile_hid(th: int, d_hid_p: int) -> int:
    """Clamp hid tile to a multiple of 128 that divides d_hid_p."""
    th = max(128, min(th, d_hid_p))
    th = (th // 128) * 128
    while d_hid_p % th:
        th -= 128
    return th


# --------------------------------------------------------------------------- #
# Kernels
# --------------------------------------------------------------------------- #
def _fused_two_linear_resident_kernel(x_ref, w1_ref, b1_ref, w2_ref, b2_ref, o_ref):
    # original_layer: h = x @ W1 + b1   (bf16 operands on the MXU, f32 accumulate)
    h = jnp.dot(x_ref[...], w1_ref[...], preferred_element_type=jnp.float32)
    h = h + b1_ref[...]                       # bias add in f32 (VPU; v5e-safe)
    # shared_layer: y = h @ W2 + b2
    y = jnp.dot(h.astype(jnp.bfloat16), w2_ref[...],
                preferred_element_type=jnp.float32)
    o_ref[...] = (y + b2_ref[...]).astype(o_ref.dtype)


def _fused_two_linear_hid_tiled_kernel(x_ref, w1_ref, b1_ref, w2_ref, b2_ref,
                                       o_ref, acc_ref):
    # D_hid-tiled fallback for when both weight matrices cannot stay resident
    # (e.g. large D on v7x's 64 MiB VMEM).  Grid = (row tiles, hid tiles).
    k = pl.program_id(1)

    @pl.when(k == 0)
    def _():
        acc_ref[...] = jnp.zeros_like(acc_ref)

    h = jnp.dot(x_ref[...], w1_ref[...], preferred_element_type=jnp.float32)
    h = h + b1_ref[...]
    acc_ref[...] += jnp.dot(h.astype(jnp.bfloat16), w2_ref[...],
                            preferred_element_type=jnp.float32)

    @pl.when(k == pl.num_programs(1) - 1)
    def _():
        o_ref[...] = (acc_ref[...] + b2_ref[...]).astype(o_ref.dtype)


# --------------------------------------------------------------------------- #
# Wrapper
# --------------------------------------------------------------------------- #
def prepare_rob_params(w1, b1, w2, b2):
    """Pad feature dims to multiples of 128 and cast weights to bf16 ONCE.

    w1: (D_in, D_hid), b1: (D_hid,) or (1, D_hid), w2: (D_hid, D_out), b2 likewise.
    Weights are stored (in, out), i.e. transposed vs. PyTorch nn.Linear.
    Zero-padding is exact for Linear layers (padded weight rows/bias entries = 0).
    """
    D_in, D_hid = w1.shape
    D_out = w2.shape[1]
    b1 = b1.reshape(1, D_hid)
    b2 = b2.reshape(1, D_out)
    d_in_p = _round_up(D_in, 128)
    d_hid_p = _round_up(D_hid, 128)
    d_out_p = _round_up(D_out, 128)
    return {
        "w1": _pad_cast_2d(w1, d_in_p, d_hid_p, jnp.bfloat16),
        "b1": _pad_cast_2d(b1, 1, d_hid_p, jnp.float32),
        "w2": _pad_cast_2d(w2, d_hid_p, d_out_p, jnp.bfloat16),
        "b2": _pad_cast_2d(b2, 1, d_out_p, jnp.float32),
        "dims": (D_in, D_hid, D_out, d_in_p, d_hid_p, d_out_p),
    }


def custom_rob_layer_prepared(x, params, *, out_dtype=None, tile_n=None,
                              tile_hid=None, force_hid_tiling=False,
                              vmem_budget_bytes=None):
    """y = (x @ W1 + b1) @ W2 + b2 with prepared (padded/cast) parameters."""
    D_in, D_hid, D_out, d_in_p, d_hid_p, d_out_p = params["dims"]
    lead_shape = x.shape[:-1]
    assert x.shape[-1] == D_in, "last dim of x must equal D_in"
    N = int(math.prod(lead_shape)) if lead_shape else 1
    x2d = x.reshape(N, D_in)

    out_dtype = x.dtype if out_dtype is None else jnp.dtype(out_dtype)
    out_isz = jnp.dtype(out_dtype).itemsize

    cap = _vmem_capacity_bytes() if vmem_budget_bytes is None else int(vmem_budget_bytes)
    budget = int(0.75 * cap)

    # ---- row tile selection ------------------------------------------------
    if tile_n is None:
        tile_n0 = _pick_tile_n(N, 512)
    else:
        tile_n0 = max(8, _round_up(min(int(tile_n), _round_up(N, 8)), 8))

    # Resident-weight VMEM footprint: bf16 weights + f32 biases single-buffered,
    # bf16 x tile + out tile double-buffered, plus the implicit f32 h temporary.
    def _resident_vmem(tn):
        return ((d_in_p * d_hid_p + d_hid_p * d_out_p) * 2
                + (d_hid_p + d_out_p) * 4
                + 2 * tn * d_in_p * 2
                + 2 * tn * d_out_p * out_isz
                + tn * d_hid_p * 4)

    def _tiled_vmem(tn, th):
        return (2 * ((d_in_p * th + th * d_out_p) * 2 + th * 4)   # dbl-buffered W/b1 tiles
                + d_out_p * 4
                + 2 * tn * d_in_p * 2
                + 2 * tn * d_out_p * out_isz
                + tn * d_out_p * 4          # f32 accumulator scratch
                + tn * th * 4)              # f32 h temporary

    resident_tile_n = None
    if not force_hid_tiling:
        t = tile_n0
        while True:
            if _resident_vmem(t) <= budget:
                resident_tile_n = t
                break
            if t <= 128:
                break
            t = max(128, _round_up(t // 2, 8))

    def _vmem_limit(needed):
        return int(min(max(int(needed * 1.25) + (2 << 20), 32 << 20),
                       int(cap * 0.95)))

    # ----------------------------------------------------------------------- #
    if resident_tile_n is not None:
        # ---------------- resident-weight path ----------------
        tn = resident_tile_n
        n_p = _round_up(N, tn)
        xp = _pad_cast_2d(x2d, n_p, d_in_p, jnp.bfloat16)
        grid = (n_p // tn,)

        flops = 2 * n_p * (d_in_p * d_hid_p + d_hid_p * d_out_p)
        bytes_accessed = (xp.size * 2
                          + params["w1"].size * 2 + params["w2"].size * 2
                          + params["b1"].size * 4 + params["b2"].size * 4
                          + n_p * d_out_p * out_isz)
        vmem_limit = _vmem_limit(_resident_vmem(tn))

        def _run(single_buffer_weights):
            res_kw = {"pipeline_mode": pl.Buffered(1)} if single_buffer_weights else {}
            in_specs = [
                pl.BlockSpec((tn, d_in_p), lambda i: (i, 0)),               # x: row-tiled
                pl.BlockSpec((d_in_p, d_hid_p), lambda i: (0, 0), **res_kw),  # W1 resident
                pl.BlockSpec((1, d_hid_p), lambda i: (0, 0), **res_kw),       # b1 resident
                pl.BlockSpec((d_hid_p, d_out_p), lambda i: (0, 0), **res_kw), # W2 resident
                pl.BlockSpec((1, d_out_p), lambda i: (0, 0), **res_kw),       # b2 resident
            ]
            return pl.pallas_call(
                _fused_two_linear_resident_kernel,
                out_shape=jax.ShapeDtypeStruct((n_p, d_out_p), out_dtype),
                grid_spec=pltpu.PrefetchScalarGridSpec(
                    num_scalar_prefetch=0,
                    grid=grid,
                    in_specs=in_specs,
                    out_specs=pl.BlockSpec((tn, d_out_p), lambda i: (i, 0)),
                ),
                compiler_params=pltpu.CompilerParams(
                    dimension_semantics=("parallel",),
                    vmem_limit_bytes=vmem_limit),
                cost_estimate=pl.CostEstimate(
                    flops=flops, transcendentals=0, bytes_accessed=bytes_accessed),
            )(xp, params["w1"], params["b1"], params["w2"], params["b2"])

        try:
            out_p = _run(True)
        except Exception:
            # Older JAX without BlockSpec pipeline_mode / Buffered(1): default buffering.
            out_p = _run(False)

    else:
        # ---------------- D_hid-tiled fallback path ----------------
        tn = tile_n0
        th = _fit_tile_hid(int(tile_hid) if tile_hid is not None else 512, d_hid_p)
        while _tiled_vmem(tn, th) > budget and th > 128:
            th = _fit_tile_hid(th - 128, d_hid_p)
        while _tiled_vmem(tn, th) > budget and tn > 64:
            tn = max(64, _round_up(tn // 2, 8))
        # TODO(synk): also tile D_out if d_in_p/d_out_p alone exceed the VMEM budget.

        n_p = _round_up(N, tn)
        xp = _pad_cast_2d(x2d, n_p, d_in_p, jnp.bfloat16)
        grid = (n_p // tn, d_hid_p // th)

        flops = 2 * n_p * (d_in_p * d_hid_p + d_hid_p * d_out_p)
        bytes_accessed = (xp.size * 2
                          + params["w1"].size * 2 + params["w2"].size * 2
                          + params["b1"].size * 4 + params["b2"].size * 4
                          + n_p * d_out_p * out_isz)
        vmem_limit = _vmem_limit(_tiled_vmem(tn, th))

        in_specs = [
            pl.BlockSpec((tn, d_in_p), lambda i, k: (i, 0)),       # x (reused across k)
            pl.BlockSpec((d_in_p, th), lambda i, k: (0, k)),       # W1 column slab
            pl.BlockSpec((1, th), lambda i, k: (0, k)),            # b1 slab
            pl.BlockSpec((th, d_out_p), lambda i, k: (k, 0)),      # W2 row slab
            pl.BlockSpec((1, d_out_p), lambda i, k: (0, 0)),       # b2 (epilogue only)
        ]
        out_p = pl.pallas_call(
            _fused_two_linear_hid_tiled_kernel,
            out_shape=jax.ShapeDtypeStruct((n_p, d_out_p), out_dtype),
            grid_spec=pltpu.PrefetchScalarGridSpec(
                num_scalar_prefetch=0,
                grid=grid,
                in_specs=in_specs,
                out_specs=pl.BlockSpec((tn, d_out_p), lambda i, k: (i, 0)),
                scratch_shapes=[pltpu.VMEM((tn, d_out_p), jnp.float32)],
            ),
            compiler_params=pltpu.CompilerParams(
                dimension_semantics=("parallel", "arbitrary"),
                vmem_limit_bytes=vmem_limit),
            cost_estimate=pl.CostEstimate(
                flops=flops, transcendentals=0, bytes_accessed=bytes_accessed),
        )(xp, params["w1"], params["b1"], params["w2"], params["b2"])

    out = out_p[:N, :D_out]
    return out.reshape(*lead_shape, D_out) if lead_shape else out.reshape(D_out)


def custom_rob_layer(x, w1, b1, w2, b2, **kwargs):
    """Convenience: pad/cast params per call. Prefer prepare_rob_params() + _prepared."""
    return custom_rob_layer_prepared(x, prepare_rob_params(w1, b1, w2, b2), **kwargs)


# --------------------------------------------------------------------------- #
# Demo / correctness check
# --------------------------------------------------------------------------- #
if __name__ == "__main__":
    key = jax.random.PRNGKey(0)
    (kx, k1, kb1, k2, kb2,
     kx2, k3, kb3, k4, kb4) = jax.random.split(key, 10)

    # --- Test 1: small Linear->Linear, resident-weight path (B=2, S=8, hidden=32)
    B, S = 2, 8
    D_in, D_hid, D_out = 32, 32, 32

    x = jax.random.normal(kx, (B, S, D_in), dtype=jnp.float32)
    w1 = jax.random.normal(k1, (D_in, D_hid), dtype=jnp.float32) * 0.05
    b1 = jax.random.normal(kb1, (1, D_hid), dtype=jnp.float32) * 0.01
    w2 = jax.random.normal(k2, (D_hid, D_out), dtype=jnp.float32) * 0.05
    b2 = jax.random.normal(kb2, (1, D_out), dtype=jnp.float32) * 0.01

    params = prepare_rob_params(w1, b1, w2, b2)        # pad + bf16 cast once
    out = custom_rob_layer_prepared(x, params)
    out = jax.block_until_ready(out)

    ref = ((x.reshape(-1, D_in) @ w1 + b1) @ w2 + b2).reshape(B, S, D_out)
    assert out.shape == ref.shape
    # bf16 MXU operands => loosen tolerance vs. the f32 reference.
    assert jnp.allclose(out, ref, atol=3e-2, rtol=3e-2), "resident path mismatch"

    # --- Test 2: force the D_hid-tiled fallback (the path taken when resident
    #             weights would not fit e.g. v7x's 64 MiB VMEM), >1 hid step.
    D_in2, D_hid2, D_out2 = 64, 320, 48
    x2 = jax.random.normal(kx2, (B, S, D_in2), dtype=jnp.float32)
    w3 = jax.random.normal(k3, (D_in2, D_hid2), dtype=jnp.float32) * 0.05
    b3 = jax.random.normal(kb3, (1, D_hid2), dtype=jnp.float32) * 0.01
    w4 = jax.random.normal(k4, (D_hid2, D_out2), dtype=jnp.float32) * 0.05
    b4 = jax.random.normal(kb4, (1, D_out2), dtype=jnp.float32) * 0.01

    out2 = custom_rob_layer(x2, w3, b3, w4, b4,
                            force_hid_tiling=True, tile_hid=128)
    out2 = jax.block_until_ready(out2)
    ref2 = ((x2.reshape(-1, D_in2) @ w3 + b3) @ w4 + b4).reshape(B, S, D_out2)
    assert jnp.allclose(out2, ref2, atol=3e-2, rtol=3e-2), "hid-tiled path mismatch"

    print("KERNEL_OK")
</pallas_src>

<mosaic_0001>
module attributes {stable_mosaic.version = 11 : i64} {
  func.func @_fused_two_linear_resident_kernel(%arg0: i32, %arg1: memref<8x128xbf16, #tpu.memory_space<vmem>>, %arg2: memref<128x128xbf16, #tpu.memory_space<vmem>>, %arg3: memref<1x128xf32, #tpu.memory_space<vmem>>, %arg4: memref<128x128xbf16, #tpu.memory_space<vmem>>, %arg5: memref<1x128xf32, #tpu.memory_space<vmem>>, %arg6: memref<8x128xf32, #tpu.memory_space<vmem>>) attributes {dimension_semantics = [#tpu.dimension_semantics<parallel>], iteration_bounds = array<i64: 2>, scalar_prefetch = 0 : i64, scratch_operands = 0 : i64, tpu.core_type = #tpu.core_type<tc>, window_params = [{transform_indices = @transform_0, window_bounds = array<i64: 8, 128>}, {pipeline_mode = #tpu.pipeline_mode<synchronous>, transform_indices = @transform_1, window_bounds = array<i64: 128, 128>}, {pipeline_mode = #tpu.pipeline_mode<synchronous>, transform_indices = @transform_2, window_bounds = array<i64: 1, 128>}, {pipeline_mode = #tpu.pipeline_mode<synchronous>, transform_indices = @transform_3, window_bounds = array<i64: 128, 128>}, {pipeline_mode = #tpu.pipeline_mode<synchronous>, transform_indices = @transform_4, window_bounds = array<i64: 1, 128>}, {transform_indices = @transform_5, window_bounds = array<i64: 8, 128>}]} {
    %c0 = arith.constant 0 : index
    %c0_0 = arith.constant 0 : index
    %0 = vector.load %arg1[%c0, %c0_0] : memref<8x128xbf16, #tpu.memory_space<vmem>>, vector<8x128xbf16>
    %c0_1 = arith.constant 0 : index
    %c0_2 = arith.constant 0 : index
    %1 = vector.load %arg2[%c0_1, %c0_2] : memref<128x128xbf16, #tpu.memory_space<vmem>>, vector<128x128xbf16>
    %cst = arith.constant dense<0.000000e+00> : vector<8x128xf32>
    %2 = tpu.matmul %0, %1, %cst {dimension_numbers = #tpu.dot_dimension_numbers<[1], [0], [0], [1], [0, 0, 1, 1], [], []>} : vector<8x128xbf16>, vector<128x128xbf16>, vector<8x128xf32> -> vector<8x128xf32>
    %c0_3 = arith.constant 0 : index
    %c0_4 = arith.constant 0 : index
    %3 = vector.load %arg3[%c0_3, %c0_4] : memref<1x128xf32, #tpu.memory_space<vmem>>, vector<1x128xf32>
    %4 = vector.broadcast %3 : vector<1x128xf32> to vector<8x128xf32>
    %5 = arith.addf %2, %4 : vector<8x128xf32>
    %6 = arith.truncf %5 : vector<8x128xf32> to vector<8x128xbf16>
    %c0_5 = arith.constant 0 : index
    %c0_6 = arith.constant 0 : index
    %7 = vector.load %arg4[%c0_5, %c0_6] : memref<128x128xbf16, #tpu.memory_space<vmem>>, vector<128x128xbf16>
    %cst_7 = arith.constant dense<0.000000e+00> : vector<8x128xf32>
    %8 = tpu.matmul %6, %7, %cst_7 {dimension_numbers = #tpu.dot_dimension_numbers<[1], [0], [0], [1], [0, 0, 1, 1], [], []>} : vector<8x128xbf16>, vector<128x128xbf16>, vector<8x128xf32> -> vector<8x128xf32>
    %c0_8 = arith.constant 0 : index
    %c0_9 = arith.constant 0 : index
    %9 = vector.load %arg5[%c0_8, %c0_9] : memref<1x128xf32, #tpu.memory_space<vmem>>, vector<1x128xf32>
    %10 = vector.broadcast %9 : vector<1x128xf32> to vector<8x128xf32>
    %11 = arith.addf %8, %10 : vector<8x128xf32>
    %c0_10 = arith.constant 0 : index
    %c0_11 = arith.constant 0 : index
    %12 = vector.load %arg6[%c0_10, %c0_11] : memref<8x128xf32, #tpu.memory_space<vmem>>, vector<8x128xf32>
    tpu.vector_store %arg6[%c0_10, %c0_11], %11 {strides = array<i32>} : memref<8x128xf32, #tpu.memory_space<vmem>>, vector<8x128xf32>,
    return
  }
  func.func @transform_0(%arg0: i32) -> (i32, i32) {
    %c0_i32 = arith.constant 0 : i32
    %c0_i32_0 = arith.constant 0 : i32
    return %arg0, %c0_i32 : i32, i32
  }
  func.func @transform_1(%arg0: i32) -> (i32, i32) {
    %c0_i32 = arith.constant 0 : i32
    %c0_i32_0 = arith.constant 0 : i32
    %c0_i32_1 = arith.constant 0 : i32
    return %c0_i32, %c0_i32_0 : i32, i32
  }
  func.func @transform_2(%arg0: i32) -> (i32, i32) {
    %c0_i32 = arith.constant 0 : i32
    %c0_i32_0 = arith.constant 0 : i32
    %c0_i32_1 = arith.constant 0 : i32
    return %c0_i32, %c0_i32_0 : i32, i32
  }
  func.func @transform_3(%arg0: i32) -> (i32, i32) {
    %c0_i32 = arith.constant 0 : i32
    %c0_i32_0 = arith.constant 0 : i32
    %c0_i32_1 = arith.constant 0 : i32
    return %c0_i32, %c0_i32_0 : i32, i32
  }
  func.func @transform_4(%arg0: i32) -> (i32, i32) {
    %c0_i32 = arith.constant 0 : i32
    %c0_i32_0 = arith.constant 0 : i32
    %c0_i32_1 = arith.constant 0 : i32
    return %c0_i32, %c0_i32_0 : i32, i32
  }
  func.func @transform_5(%arg0: i32) -> (i32, i32) {
    %c0_i32 = arith.constant 0 : i32
    %c0_i32_0 = arith.constant 0 : i32
    return %arg0, %c0_i32 : i32, i32
  }
}

module attributes {stable_mosaic.version = 11 : i64} {
  func.func @_fused_two_linear_resident_kernel(%arg0: i32, %arg1: memref<8x128xbf16, #tpu.memory_space<vmem>>, %arg2: memref<128x128xbf16, #tpu.memory_space<vmem>>, %arg3: memref<1x128xf32, #tpu.memory_space<vmem>>, %arg4: memref<128x128xbf16, #tpu.memory_space<vmem>>, %arg5: memref<1x128xf32, #tpu.memory_space<vmem>>, %arg6: memref<8x128xf32, #tpu.memory_space<vmem>>) attributes {dimension_semantics = [#tpu.dimension_semantics<parallel>], iteration_bounds = array<i64: 2>, scalar_prefetch = 0 : i64, scratch_operands = 0 : i64, tpu.core_type = #tpu.core_type<tc>, window_params = [{transform_indices = @transform_0, window_bounds = array<i64: 8, 128>}, {pipeline_mode = #tpu.pipeline_mode<synchronous>, transform_indices = @transform_1, window_bounds = array<i64: 128, 128>}, {pipeline_mode = #tpu.pipeline_mode<synchronous>, transform_indices = @transform_2, window_bounds = array<i64: 1, 128>}, {pipeline_mode = #tpu.pipeline_mode<synchronous>, transform_indices = @transform_3, window_bounds = array<i64: 128, 128>}, {pipeline_mode = #tpu.pipeline_mode<synchronous>, transform_indices = @transform_4, window_bounds = array<i64: 1, 128>}, {transform_indices = @transform_5, window_bounds = array<i64: 8, 128>}]} {
    %c0 = arith.constant 0 : index
    %c0_0 = arith.constant 0 : index
    %0 = vector.load %arg1[%c0, %c0_0] : memref<8x128xbf16, #tpu.memory_space<vmem>>, vector<8x128xbf16>
    %c0_1 = arith.constant 0 : index
    %c0_2 = arith.constant 0 : index
    %1 = vector.load %arg2[%c0_1, %c0_2] : memref<128x128xbf16, #tpu.memory_space<vmem>>, vector<128x128xbf16>
    %cst = arith.constant dense<0.000000e+00> : vector<8x128xf32>
    %2 = tpu.matmul %0, %1, %cst {dimension_numbers = #tpu.dot_dimension_numbers<[1], [0], [0], [1], [0, 0, 1, 1], [], []>} : vector<8x128xbf16>, vector<128x128xbf16>, vector<8x128xf32> -> vector<8x128xf32>
    %c0_3 = arith.constant 0 : index
    %c0_4 = arith.constant 0 : index
    %3 = vector.load %arg3[%c0_3, %c0_4] : memref<1x128xf32, #tpu.memory_space<vmem>>, vector<1x128xf32>
    %4 = vector.broadcast %3 : vector<1x128xf32> to vector<8x128xf32>
    %5 = arith.addf %2, %4 : vector<8x128xf32>
    %6 = arith.truncf %5 : vector<8x128xf32> to vector<8x128xbf16>
    %c0_5 = arith.constant 0 : index
    %c0_6 = arith.constant 0 : index
    %7 = vector.load %arg4[%c0_5, %c0_6] : memref<128x128xbf16, #tpu.memory_space<vmem>>, vector<128x128xbf16>
    %cst_7 = arith.constant dense<0.000000e+00> : vector<8x128xf32>
    %8 = tpu.matmul %6, %7, %cst_7 {dimension_numbers = #tpu.dot_dimension_numbers<[1], [0], [0], [1], [0, 0, 1, 1], [], []>} : vector<8x128xbf16>, vector<128x128xbf16>, vector<8x128xf32> -> vector<8x128xf32>
    %c0_8 = arith.constant 0 : index
    %c0_9 = arith.constant 0 : index
    %9 = vector.load %arg5[%c0_8, %c0_9] : memref<1x128xf32, #tpu.memory_space<vmem>>, vector<1x128xf32>
    %10 = vector.broadcast %9 : vector<1x128xf32> to vector<8x128xf32>
    %11 = arith.addf %8, %10 : vector<8x128xf32>
    %c0_10 = arith.constant 0 : index
    %c0_11 = arith.constant 0 : index
    %12 = vector.load %arg6[%c0_10, %c0_11] : memref<8x128xf32, #tpu.memory_space<vmem>>, vector<8x128xf32>
    tpu.vector_store %arg6[%c0_10, %c0_11], %11 {strides = array<i32>} : memref<8x128xf32, #tpu.memory_space<vmem>>, vector<8x128xf32>,
    return
  }
  func.func @transform_0(%arg0: i32) -> (i32, i32) {
    %c0_i32 = arith.constant 0 : i32
    %c0_i32_0 = arith.constant 0 : i32
    return %arg0, %c0_i32 : i32, i32
  }
  func.func @transform_1(%arg0: i32) -> (i32, i32) {
    %c0_i32 = arith.constant 0 : i32
    %c0_i32_0 = arith.constant 0 : i32
    %c0_i32_1 = arith.constant 0 : i32
    return %c0_i32, %c0_i32_0 : i32, i32
  }
  func.func @transform_2(%arg0: i32) -> (i32, i32) {
    %c0_i32 = arith.constant 0 : i32
    %c0_i32_0 = arith.constant 0 : i32
    %c0_i32_1 = arith.constant 0 : i32
    return %c0_i32, %c0_i32_0 : i32, i32
  }
  func.func @transform_3(%arg0: i32) -> (i32, i32) {
    %c0_i32 = arith.constant 0 : i32
    %c0_i32_0 = arith.constant 0 : i32
    %c0_i32_1 = arith.constant 0 : i32
    return %c0_i32, %c0_i32_0 : i32, i32
  }
  func.func @transform_4(%arg0: i32) -> (i32, i32) {
    %c0_i32 = arith.constant 0 : i32
    %c0_i32_0 = arith.constant 0 : i32
    %c0_i32_1 = arith.constant 0 : i32
    return %c0_i32, %c0_i32_0 : i32, i32
  }
  func.func @transform_5(%arg0: i32) -> (i32, i32) {
    %c0_i32 = arith.constant 0 : i32
    %c0_i32_0 = arith.constant 0 : i32
    return %arg0, %c0_i32 : i32, i32
  }
}

</mosaic_0001>

<llo_original>
// kernel: tpu_custom_call.1
$region0: #{tpu_custom_call.1}
  #allocation0 [shape = 'u32[]', space=smem, size = 0x4, offset = 0x4, fixed_abs, tag = 'smem constant byte address 0x4 - core index']
  #allocation1 [shape = 'u32[144,128]{1,0:T(1,128)}', space=vmem, size = 0x12000, scoped, tag = 'internal scratch']
  %s0 = inlined_call_operand.hbm [shape: bf16[16,128], index: 0, kind: input, shape index: {}]
  %s1 = inlined_call_operand.hbm [shape: bf16[128,128], index: 1, kind: input, shape index: {}]
  %s2 = inlined_call_operand.vmem [shape: f32[1,128], index: 2, kind: input, shape index: {}]
  %s3 = inlined_call_operand.hbm [shape: bf16[128,128], index: 3, kind: input, shape index: {}]
  %s4 = inlined_call_operand.vmem [shape: f32[1,128], index: 4, kind: input, shape index: {}]
  %s5 = inlined_call_operand.hbm [shape: f32[16,128], index: 5, kind: output, shape index: {}]
  %s6 = sld [smem:[#allocation0]]
  $region65: #{tpu_custom_call.1} parent=0
    _
  %s8 = ssub.s32 1, %s6
  %s9 = scalar_select 0, %s8, %s6
  $region1: #{tpu_custom_call.1} parent=0
    #allocation2 [shape = 'u8[4096]{0}', space=vmem, size = 0x1000, scoped, tag = 'input window, operand 0']
    #allocation3 [shape = 's32[2]{0}', space=sflag, size = 0x8, scoped, tag = 'scoped memory for tpu_custom_call.1']
    #allocation4 [shape = 's32[2]{0}', space=sflag, size = 0x8, scoped, tag = 'scoped memory for tpu_custom_call.1']
    #allocation5 [shape = 'u8[32768]{0}', space=vmem, size = 0x8000, scoped, tag = 'input window, operand 1, single buffered']
    #allocation6 [shape = 's32[1]{0}', space=sflag, size = 0x4, scoped, tag = 'scoped memory for tpu_custom_call.1']
    #allocation7 [shape = 'u8[32768]{0}', space=vmem, size = 0x8000, scoped, tag = 'input window, operand 3, single buffered']
    #allocation8 [shape = 'u8[8192]{0}', space=vmem, size = 0x2000, scoped, tag = 'output window, operand 0']
    %10 = vsyncpa [#allocation3], 0
    %s11 = scalar_lea.sflag [#allocation3], 1
    %12 = vsyncpa %s11, 0
    %13 = vsyncpa [#allocation6], 0
    %14 = vsyncpa [#allocation4], 0
    %s15 = scalar_lea.sflag [#allocation4], 1
    %16 = vsyncpa %s15, 0
    loop: start=0, step=1, limit=4
    $region2: #{tpu_custom_call.1} parent=1 // loop_pre_header
      _
    $region3: #{tpu_custom_call.1} parent=1 // loop_header
      %s18 = sphi 0, %s22
      %p19 = scmp.ge.s32.totalorder %s18, 4
      %s28 = sphi 0, %s30
      %s31 = sphi 0, %s28
      %s32 = sphi 0, %s31
      %s48 = sphi 0, %s32
      %s52 = sphi 0, %s52
      %s54 = sphi 0, %s52
      %s55 = sphi 0, %s54
      %s69 = sphi 0, %s55
      %s73 = sphi 0, %s73
      %s75 = sphi 0, %s73
      %s76 = sphi 0, %s75
      %s90 = sphi 0, %s76
      %s94 = sphi 0, %s94
      %s96 = sphi 0, %s94
      %s97 = sphi 0, %s96
      %s111 = sphi 0, %s97
      %s115 = sphi 0, %s115
      %s117 = sphi 0, %s115
      %s118 = sphi 0, %s117
      %s132 = sphi 0, %s118
      %s138 = sphi 0, %s140
      %s141 = sphi 0, %s138
      %s142 = sphi 0, %s141
      %s158 = sphi 0, %s142
    $region4: #{tpu_custom_call.1} parent=1 // loop_header_branch
      %21 = sbr.rel (%p19) target = $region8
    $region5: #{tpu_custom_call.1} parent=1 // loop_body
      %s23 = ssub.s32 %s18, 1
      %s24 = ssub.s32 %s18, 2
      %s25 = sadd.s32 %s18, 1
      %s26 = ssub.s32 %s18, %s25
      %p27 = scmp.eq.s32.totalorder %s26, 0
      %s29 = sadd.s32 %s28, 1
      %s30 = scalar_select %p27, %s28, %s29
      %p33 = pneg %p27
      %p34 = scmp.eq.s32.totalorder %s18, 1
      %p35 = por %p33, %p34
      %p36 = scmp.ne.s32.totalorder %s28, %s31
      %p37 = scmp.eq.s32.totalorder %s18, 0
      %p38 = por %p36, %p37
      %p39 = scmp.ne.s32.totalorder %s28, %s31
      %p40 = scmp.eq.s32.totalorder %s23, 1
      %p41 = por %p39, %p40
      %p42 = scmp.ne.s32.totalorder %s31, %s32
      %p43 = scmp.eq.s32.totalorder %s23, 0
      %p44 = por %p42, %p43
      %p45 = scmp.ne.s32.totalorder %s31, %s32
      %p46 = scmp.eq.s32.totalorder %s24, 1
      %p47 = por %p45, %p46
      %p49 = scmp.ne.s32.totalorder %s32, %s48
      %p50 = scmp.eq.s32.totalorder %s24, 0
      %p51 = por %p49, %p50
      %s53 = sadd.s32 %s52, 1
      %p56 = scmp.eq.s32.totalorder %s18, 1
      %p57 = scmp.ne.s32.totalorder %s52, %s54
      %p58 = scmp.eq.s32.totalorder %s18, 0
      %p59 = por %p57, %p58
      %p60 = scmp.ne.s32.totalorder %s52, %s54
      %p61 = scmp.eq.s32.totalorder %s23, 1
      %p62 = por %p60, %p61
      %p63 = scmp.ne.s32.totalorder %s54, %s55
      %p64 = scmp.eq.s32.totalorder %s23, 0
      %p65 = por %p63, %p64
      %p66 = scmp.ne.s32.totalorder %s54, %s55
      %p67 = scmp.eq.s32.totalorder %s24, 1
      %p68 = por %p66, %p67
      %p70 = scmp.ne.s32.totalorder %s55, %s69
      %p71 = scmp.eq.s32.totalorder %s24, 0
      %p72 = por %p70, %p71
      %s74 = sadd.s32 %s73, 1
      %p77 = scmp.eq.s32.totalorder %s18, 1
      %p78 = scmp.ne.s32.totalorder %s73, %s75
      %p79 = scmp.eq.s32.totalorder %s18, 0
      %p80 = por %p78, %p79
      %p81 = scmp.ne.s32.totalorder %s73, %s75
      %p82 = scmp.eq.s32.totalorder %s23, 1
      %p83 = por %p81, %p82
      %p84 = scmp.ne.s32.totalorder %s75, %s76
      %p85 = scmp.eq.s32.totalorder %s23, 0
      %p86 = por %p84, %p85
      %p87 = scmp.ne.s32.totalorder %s75, %s76
      %p88 = scmp.eq.s32.totalorder %s24, 1
      %p89 = por %p87, %p88
      %p91 = scmp.ne.s32.totalorder %s76, %s90
      %p92 = scmp.eq.s32.totalorder %s24, 0
      %p93 = por %p91, %p92
      %s95 = sadd.s32 %s94, 1
      %p98 = scmp.eq.s32.totalorder %s18, 1
      %p99 = scmp.ne.s32.totalorder %s94, %s96
      %p100 = scmp.eq.s32.totalorder %s18, 0
      %p101 = por %p99, %p100
      %p102 = scmp.ne.s32.totalorder %s94, %s96
      %p103 = scmp.eq.s32.totalorder %s23, 1
      %p104 = por %p102, %p103
      %p105 = scmp.ne.s32.totalorder %s96, %s97
      %p106 = scmp.eq.s32.totalorder %s23, 0
      %p107 = por %p105, %p106
      %p108 = scmp.ne.s32.totalorder %s96, %s97
      %p109 = scmp.eq.s32.totalorder %s24, 1
      %p110 = por %p108, %p109
      %p112 = scmp.ne.s32.totalorder %s97, %s111
      %p113 = scmp.eq.s32.totalorder %s24, 0
      %p114 = por %p112, %p113
      %s116 = sadd.s32 %s115, 1
      %p119 = scmp.eq.s32.totalorder %s18, 1
      %p120 = scmp.ne.s32.totalorder %s115, %s117
      %p121 = scmp.eq.s32.totalorder %s18, 0
      %p122 = por %p120, %p121
      %p123 = scmp.ne.s32.totalorder %s115, %s117
      %p124 = scmp.eq.s32.totalorder %s23, 1
      %p125 = por %p123, %p124
      %p126 = scmp.ne.s32.totalorder %s117, %s118
      %p127 = scmp.eq.s32.totalorder %s23, 0
      %p128 = por %p126, %p127
      %p129 = scmp.ne.s32.totalorder %s117, %s118
      %p130 = scmp.eq.s32.totalorder %s24, 1
      %p131 = por %p129, %p130
      %p133 = scmp.ne.s32.totalorder %s118, %s132
      %p134 = scmp.eq.s32.totalorder %s24, 0
      %p135 = por %p133, %p134
      %s136 = ssub.s32 %s18, %s25
      %p137 = scmp.eq.s32.totalorder %s136, 0
      %s139 = sadd.s32 %s138, 1
      %s140 = scalar_select %p137, %s138, %s139
      %p143 = pneg %p137
      %p144 = scmp.eq.s32.totalorder %s18, 1
      %p145 = por %p143, %p144
      %p146 = scmp.ne.s32.totalorder %s138, %s141
      %p147 = scmp.eq.s32.totalorder %s18, 0
      %p148 = por %p146, %p147
      %p149 = scmp.ne.s32.totalorder %s138, %s141
      %p150 = scmp.eq.s32.totalorder %s23, 1
      %p151 = por %p149, %p150
      %p152 = scmp.ne.s32.totalorder %s141, %s142
      %p153 = scmp.eq.s32.totalorder %s23, 0
      %p154 = por %p152, %p153
      %p155 = scmp.ne.s32.totalorder %s141, %s142
      %p156 = scmp.eq.s32.totalorder %s24, 1
      %p157 = por %p155, %p156
      %p159 = scmp.ne.s32.totalorder %s142, %s158
      %p160 = scmp.eq.s32.totalorder %s24, 0
      %p161 = por %p159, %p160
      %p162 = scmp.le.s32.totalorder 1, %s18
      %p163 = scmp.lt.s32.totalorder %s18, 3
      %p164 = pnand %p162, %p163
      %p165 = pneg %p164
      // Predicated region
      $region9: #{tpu_custom_call.1} parent=5 // pred_check
        _
      $region10: #{tpu_custom_call.1} parent=5 // pred_check_branch
        %167 = sbr.rel (%p164) target = $region12
      $region11: #{tpu_custom_call.1} parent=5 // pred_region
        %s168 = ssub.s32 %s18, 1
        // Predicated region
        $region13: #{tpu_custom_call.1} parent=11 // pred_check
          %p169 = pneg %p65
        $region14: #{tpu_custom_call.1} parent=11 // pred_check_branch
          %171 = sbr.rel (%p169) target = $region16
        $region15: #{tpu_custom_call.1} parent=11 // pred_region
          %s173 = ssub.s32 1024, 1024
          %174 = vsyncadd [#allocation6], %s173
          %s175 = sshll.u32 [#allocation5], 4
          %s176 = int_to_ptr.vmem [resolvable:$true] %s175
          %181 = dma.hbm_to_vmem [thread:$0]  %s1, 1024, %s176, [#allocation6], 64, 64, 4
        $region16: #{tpu_custom_call.1} parent=11 // pred_fallthru
          _
        // Predicated region
        $region17: #{tpu_custom_call.1} parent=11 // pred_check
          %p182 = pneg %p86
        $region18: #{tpu_custom_call.1} parent=11 // pred_check_branch
          %184 = sbr.rel (%p182) target = $region20
        $region19: #{tpu_custom_call.1} parent=11 // pred_region
          _
        $region20: #{tpu_custom_call.1} parent=11 // pred_fallthru
          _
        // Predicated region
        $region21: #{tpu_custom_call.1} parent=11 // pred_check
          %p185 = pneg %p107
        $region22: #{tpu_custom_call.1} parent=11 // pred_check_branch
          %187 = sbr.rel (%p185) target = $region24
        $region23: #{tpu_custom_call.1} parent=11 // pred_region
          %s189 = ssub.s32 1024, 1024
          %190 = vsyncadd [#allocation6], %s189
          %s191 = sshll.u32 [#allocation7], 4
          %s192 = int_to_ptr.vmem [resolvable:$true] %s191
          %197 = dma.hbm_to_vmem [thread:$0]  %s3, 1024, %s192, [#allocation6], 64, 64, 4
        $region24: #{tpu_custom_call.1} parent=11 // pred_fallthru
          _
        // Predicated region
        $region25: #{tpu_custom_call.1} parent=11 // pred_check
          %p198 = pneg %p128
        $region26: #{tpu_custom_call.1} parent=11 // pred_check_branch
          %200 = sbr.rel (%p198) target = $region28
        $region27: #{tpu_custom_call.1} parent=11 // pred_region
          _
        $region28: #{tpu_custom_call.1} parent=11 // pred_fallthru
          _
      $region12: #{tpu_custom_call.1} parent=5 // pred_fallthru
        _
      %p201 = scmp.lt.s32.totalorder %s18, 2
      // Predicated region
      $region29: #{tpu_custom_call.1} parent=5 // pred_check
        %p202 = pneg %p201
      $region30: #{tpu_custom_call.1} parent=5 // pred_check_branch
        %204 = sbr.rel (%p202) target = $region32
      $region31: #{tpu_custom_call.1} parent=5 // pred_region
        // Predicated region
        $region33: #{tpu_custom_call.1} parent=31 // pred_check
          %p205 = pneg %p38
        $region34: #{tpu_custom_call.1} parent=31 // pred_check_branch
          %207 = sbr.rel (%p205) target = $region36
        $region35: #{tpu_custom_call.1} parent=31 // pred_region
          %s208 = sand.u32 %s28, 1
          %s209 = scalar_lea.sflag [#allocation3], %s208
          %s210 = sand.u32 %s28, 1
          %s211 = smul.addr %s210, 4
          %s212 = scalar_lea.vmem [#allocation2], %s211
          %s214 = ssub.s32 64, 64
          %215 = vsyncadd %s209, %s214
          %s216 = smul.addr %s18, 64
          %s217 = scalar_lea.hbm %s0, %s216
          %s219 = sshll.u32 %s212, 4
          %s220 = int_to_ptr.vmem [resolvable:$true] %s219
          %222 = dma.hbm_to_vmem [thread:$0]  %s217, 64, %s220, %s209
        $region36: #{tpu_custom_call.1} parent=31 // pred_fallthru
          _
      $region32: #{tpu_custom_call.1} parent=5 // pred_fallthru
        _
      %p223 = scmp.le.s32.totalorder 1, %s18
      %p224 = scmp.lt.s32.totalorder %s18, 3
      %p225 = pnand %p223, %p224
      %p226 = pneg %p225
      // Predicated region
      $region37: #{tpu_custom_call.1} parent=5 // pred_check
        _
      $region38: #{tpu_custom_call.1} parent=5 // pred_check_branch
        %228 = sbr.rel (%p225) target = $region40
      $region39: #{tpu_custom_call.1} parent=5 // pred_region
        %s229 = ssub.s32 %s18, 1
        %s230 = sand.u32 %s31, 1
        %s231 = scalar_lea.sflag [#allocation3], %s230
        %s232 = sand.u32 %s31, 1
        %s233 = smul.addr %s232, 4
        %s234 = scalar_lea.vmem [#allocation2], %s233
        // Predicated region
        $region41: #{tpu_custom_call.1} parent=39 // pred_check
          %p235 = pneg %p44
        $region42: #{tpu_custom_call.1} parent=39 // pred_check_branch
          %237 = sbr.rel (%p235) target = $region44
        $region43: #{tpu_custom_call.1} parent=39 // pred_region
          %238 = dma.done %s231, 64
        $region44: #{tpu_custom_call.1} parent=39 // pred_fallthru
          _
        // Predicated region
        $region45: #{tpu_custom_call.1} parent=39 // pred_check
          %p239 = pneg %p65
        $region46: #{tpu_custom_call.1} parent=39 // pred_check_branch
          %241 = sbr.rel (%p239) target = $region48
        $region47: #{tpu_custom_call.1} parent=39 // pred_region
          %242 = dma.done [#allocation6], 1024
        $region48: #{tpu_custom_call.1} parent=39 // pred_fallthru
          _
        // Predicated region
        $region49: #{tpu_custom_call.1} parent=39 // pred_check
          %p243 = pneg %p107
        $region50: #{tpu_custom_call.1} parent=39 // pred_check_branch
          %245 = sbr.rel (%p243) target = $region52
        $region51: #{tpu_custom_call.1} parent=39 // pred_region
          %246 = dma.done [#allocation6], 1024
        $region52: #{tpu_custom_call.1} parent=39 // pred_fallthru
          _
        %s247 = sand.u32 %s31, 1
        %s248 = scalar_lea.sflag [#allocation3], %s247
        %s249 = sand.u32 %s31, 1
        %s250 = smul.addr %s249, 4
        %s251 = scalar_lea.vmem [#allocation2], %s250
        %p252 = pneg %p44
        %p253 = pneg %p41
        %p254 = pneg %p65
        %p255 = pneg %p62
        %p256 = pneg %p86
        %p257 = pneg %p83
        %p258 = pneg %p107
        %p259 = pneg %p104
        %p260 = pneg %p128
        %p261 = pneg %p125
        %p262 = pneg %p154
        %p263 = pneg %p151
        %s264 = sand.u32 %s141, 1
        %s265 = scalar_lea.sflag [#allocation4], %s264
        %s266 = sand.u32 %s141, 1
        %s267 = smul.addr %s266, 8
        %s268 = scalar_lea.vmem [#allocation8], %s267
        %v270 = vld [vmem:[%s234] sm:$0xf]
        %v271 = vld [vmem:[#allocation5] sm:$0xf]
        %v272 = vld [vmem:[#allocation5 + $0x4] sm:$0xf]
        %v273 = vld [vmem:[#allocation5 + $0x8] sm:$0xf]
        %v274 = vld [vmem:[#allocation5 + $0xc] sm:$0xf]
        %v275 = vld [vmem:[#allocation5 + $0x10] sm:$0xf]
        %v276 = vld [vmem:[#allocation5 + $0x14] sm:$0xf]
        %v277 = vld [vmem:[#allocation5 + $0x18] sm:$0xf]
        %v278 = vld [vmem:[#allocation5 + $0x1c] sm:$0xf]
        %v279 = vld [vmem:[#allocation5 + $0x20] sm:$0xf]
        %v280 = vld [vmem:[#allocation5 + $0x24] sm:$0xf]
        %v281 = vld [vmem:[#allocation5 + $0x28] sm:$0xf]
        %v282 = vld [vmem:[#allocation5 + $0x2c] sm:$0xf]
        %v283 = vld [vmem:[#allocation5 + $0x30] sm:$0xf]
        %v284 = vld [vmem:[#allocation5 + $0x34] sm:$0xf]
        %v285 = vld [vmem:[#allocation5 + $0x38] sm:$0xf]
        %v286 = vld [vmem:[#allocation5 + $0x3c] sm:$0xf]
        %v287 = vld [vmem:[%s2] sm:$0x1]
        %v289 = vlaneseq
        %v290 = vshrl.u32 %v289, 7
        %v291 = vsub.s32 0, %v290
        %v292 = vrot.slane %v287, %v291
        %v310 = vunpack.c.l.b16 %v271
        %v311 = vunpack.c.l.b16 %v272
        %v312 = vunpack.c.l.b16 %v273
        %v313 = vunpack.c.l.b16 %v274
        %v314 = vunpack.c.l.b16 %v275
        %v315 = vunpack.c.l.b16 %v276
        %v316 = vunpack.c.l.b16 %v277
        %v317 = vunpack.c.l.b16 %v278
        %v318 = vunpack.c.l.b16 %v279
        %v319 = vunpack.c.l.b16 %v280
        %v320 = vunpack.c.l.b16 %v281
        %v321 = vunpack.c.l.b16 %v282
        %v322 = vunpack.c.l.b16 %v283
        %v323 = vunpack.c.l.b16 %v284
        %v324 = vunpack.c.l.b16 %v285
        %v325 = vunpack.c.l.b16 %v286
        %v326 = vpack.c.b16 %v311, %v310
        %v327 = vpack.c.b16 %v313, %v312
        %v328 = vpack.c.b16 %v315, %v314
        %v329 = vpack.c.b16 %v317, %v316
        %v330 = vpack.c.b16 %v319, %v318
        %v331 = vpack.c.b16 %v321, %v320
        %v332 = vpack.c.b16 %v323, %v322
        %v333 = vpack.c.b16 %v325, %v324
        %342 = vmatprep.subr.bf16.mxu0 0
        %343 = vmatpush1.bf16.msra.mxu0 %v326
        %344 = vmatprep.subr.bf16.mxu0 0
        %345 = vmatpush1.bf16.msra.mxu0 %v327
        %346 = vmatprep.subr.bf16.mxu0 0
        %347 = vmatpush1.bf16.msra.mxu0 %v328
        %348 = vmatprep.subr.bf16.mxu0 0
        %349 = vmatpush1.bf16.msra.mxu0 %v329
        %350 = vmatprep.subr.bf16.mxu0 0
        %351 = vmatpush1.bf16.msra.mxu0 %v330
        %352 = vmatprep.subr.bf16.mxu0 0
        %353 = vmatpush1.bf16.msra.mxu0 %v331
        %354 = vmatprep.subr.bf16.mxu0 0
        %355 = vmatpush1.bf16.msra.mxu0 %v332
        %356 = vmatprep.subr.bf16.mxu0 0
        %357 = vmatpush1.bf16.msra.mxu0 %v333
        %358 = vmatprep.subr.bf16.mxu0 0
        %359 = vmatpush1.bf16.msra.mxu0 0
        %360 = vmatprep.subr.bf16.mxu0 0
        %361 = vmatpush1.bf16.msra.mxu0 0
        %362 = vmatprep.subr.bf16.mxu0 0
        %363 = vmatpush1.bf16.msra.mxu0 0
        %364 = vmatprep.subr.bf16.mxu0 0
        %365 = vmatpush1.bf16.msra.mxu0 0
        %366 = vmatprep.subr.bf16.mxu0 0
        %367 = vmatpush1.bf16.msra.mxu0 0
        %368 = vmatprep.subr.bf16.mxu0 0
        %369 = vmatpush1.bf16.msra.mxu0 0
        %370 = vmatprep.subr.bf16.mxu0 0
        %371 = vmatpush1.bf16.msra.mxu0 0
        %372 = vmatprep.subr.bf16.mxu0 0
        %373 = vmatpush1.bf16.msra.mxu0 0
        %374 = vmatprep.mubr.bf16.mxu0 0
        %375 = vmatmul.mubr.bf16.gmra.mrb[0].mxu0 %v270
        %v376 = vpop.f32.mrb[0].mxu0
        %v377 = vadd.f32 %v292, %v376
        %v378 = vpop.f32.mrb[0].mxu0
        %v379 = vpop.f32.mrb[0].mxu0
        %v380 = vpop.f32.mrb[0].mxu0
        %381 = vdwg.mxu0
        %v382 = vpack.c.bf16 %v377, %v377
        %v383 = vld [vmem:[#allocation7] sm:$0xf]
        %v384 = vld [vmem:[#allocation7 + $0x4] sm:$0xf]
        %v385 = vld [vmem:[#allocation7 + $0x8] sm:$0xf]
        %v386 = vld [vmem:[#allocation7 + $0xc] sm:$0xf]
        %v387 = vld [vmem:[#allocation7 + $0x10] sm:$0xf]
        %v388 = vld [vmem:[#allocation7 + $0x14] sm:$0xf]
        %v389 = vld [vmem:[#allocation7 + $0x18] sm:$0xf]
        %v390 = vld [vmem:[#allocation7 + $0x1c] sm:$0xf]
        %v391 = vld [vmem:[#allocation7 + $0x20] sm:$0xf]
        %v392 = vld [vmem:[#allocation7 + $0x24] sm:$0xf]
        %v393 = vld [vmem:[#allocation7 + $0x28] sm:$0xf]
        %v394 = vld [vmem:[#allocation7 + $0x2c] sm:$0xf]
        %v395 = vld [vmem:[#allocation7 + $0x30] sm:$0xf]
        %v396 = vld [vmem:[#allocation7 + $0x34] sm:$0xf]
        %v397 = vld [vmem:[#allocation7 + $0x38] sm:$0xf]
        %v398 = vld [vmem:[#allocation7 + $0x3c] sm:$0xf]
        %v399 = vld [vmem:[%s4] sm:$0x1]
        %v401 = vlaneseq
        %v402 = vshrl.u32 %v401, 7
        %v403 = vsub.s32 0, %v402
        %v404 = vrot.slane %v399, %v403
        %v422 = vunpack.c.l.b16 %v383
        %v423 = vunpack.c.l.b16 %v384
        %v424 = vunpack.c.l.b16 %v385
        %v425 = vunpack.c.l.b16 %v386
        %v426 = vunpack.c.l.b16 %v387
        %v427 = vunpack.c.l.b16 %v388
        %v428 = vunpack.c.l.b16 %v389
        %v429 = vunpack.c.l.b16 %v390
        %v430 = vunpack.c.l.b16 %v391
        %v431 = vunpack.c.l.b16 %v392
        %v432 = vunpack.c.l.b16 %v393
        %v433 = vunpack.c.l.b16 %v394
        %v434 = vunpack.c.l.b16 %v395
        %v435 = vunpack.c.l.b16 %v396
        %v436 = vunpack.c.l.b16 %v397
        %v437 = vunpack.c.l.b16 %v398
        %v438 = vpack.c.b16 %v423, %v422
        %v439 = vpack.c.b16 %v425, %v424
        %v440 = vpack.c.b16 %v427, %v426
        %v441 = vpack.c.b16 %v429, %v428
        %v442 = vpack.c.b16 %v431, %v430
        %v443 = vpack.c.b16 %v433, %v432
        %v444 = vpack.c.b16 %v435, %v434
        %v445 = vpack.c.b16 %v437, %v436
        %454 = vmatprep.subr.bf16.mxu0 0
        %455 = vmatpush1.bf16.msra.mxu0 %v438
        %456 = vmatprep.subr.bf16.mxu0 0
        %457 = vmatpush1.bf16.msra.mxu0 %v439
        %458 = vmatprep.subr.bf16.mxu0 0
        %459 = vmatpush1.bf16.msra.mxu0 %v440
        %460 = vmatprep.subr.bf16.mxu0 0
        %461 = vmatpush1.bf16.msra.mxu0 %v441
        %462 = vmatprep.subr.bf16.mxu0 0
        %463 = vmatpush1.bf16.msra.mxu0 %v442
        %464 = vmatprep.subr.bf16.mxu0 0
        %465 = vmatpush1.bf16.msra.mxu0 %v443
        %466 = vmatprep.subr.bf16.mxu0 0
        %467 = vmatpush1.bf16.msra.mxu0 %v444
        %468 = vmatprep.subr.bf16.mxu0 0
        %469 = vmatpush1.bf16.msra.mxu0 %v445
        %470 = vmatprep.subr.bf16.mxu0 0
        %471 = vmatpush1.bf16.msra.mxu0 0
        %472 = vmatprep.subr.bf16.mxu0 0
        %473 = vmatpush1.bf16.msra.mxu0 0
        %474 = vmatprep.subr.bf16.mxu0 0
        %475 = vmatpush1.bf16.msra.mxu0 0
        %476 = vmatprep.subr.bf16.mxu0 0
        %477 = vmatpush1.bf16.msra.mxu0 0
        %478 = vmatprep.subr.bf16.mxu0 0
        %479 = vmatpush1.bf16.msra.mxu0 0
        %480 = vmatprep.subr.bf16.mxu0 0
        %481 = vmatpush1.bf16.msra.mxu0 0
        %482 = vmatprep.subr.bf16.mxu0 0
        %483 = vmatpush1.bf16.msra.mxu0 0
        %484 = vmatprep.subr.bf16.mxu0 0
        %485 = vmatpush1.bf16.msra.mxu0 0
        %486 = vmatprep.mubr.bf16.mxu0 0
        %487 = vmatmul.mubr.bf16.gmra.mrb[0].mxu0 %v382
        %v488 = vpop.f32.mrb[0].mxu0
        %v489 = vadd.f32 %v404, %v488
        %v490 = vpop.f32.mrb[0].mxu0
        %v491 = vpop.f32.mrb[0].mxu0
        %v492 = vpop.f32.mrb[0].mxu0
        %493 = vdwg.mxu0
        %494 = vst [vmem:[%s268] sm:$0xff] %v489
        %s495 = sand.u32 %s141, 1
        %s496 = scalar_lea.sflag [#allocation4], %s495
        %s497 = sand.u32 %s141, 1
        %s498 = smul.addr %s497, 8
        %s499 = scalar_lea.vmem [#allocation8], %s498
        // Predicated region
        $region53: #{tpu_custom_call.1} parent=39 // pred_check
          %p500 = pneg %p151
        $region54: #{tpu_custom_call.1} parent=39 // pred_check_branch
          %502 = sbr.rel (%p500) target = $region56
        $region55: #{tpu_custom_call.1} parent=39 // pred_region
          %s504 = ssub.s32 128, 128
          %505 = vsyncadd %s496, %s504
          %s506 = smul.addr %s23, 128
          %s507 = scalar_lea.hbm %s5, %s506
          %s509 = sshll.u32 %s499, 4
          %s510 = int_to_ptr.vmem [resolvable:$true] %s509
          %512 = dma.vmem_to_hbm [thread:$0]  %s510, 128, %s507, %s496
        $region56: #{tpu_custom_call.1} parent=39 // pred_fallthru
          _
      $region40: #{tpu_custom_call.1} parent=5 // pred_fallthru
        _
      %p513 = scmp.le.s32.totalorder 2, %s18
      // Predicated region
      $region57: #{tpu_custom_call.1} parent=5 // pred_check
        %p514 = pneg %p513
      $region58: #{tpu_custom_call.1} parent=5 // pred_check_branch
        %516 = sbr.rel (%p514) target = $region60
      $region59: #{tpu_custom_call.1} parent=5 // pred_region
        %s517 = ssub.s32 %s18, 2
        // Predicated region
        $region61: #{tpu_custom_call.1} parent=59 // pred_check
          %p518 = pneg %p157
        $region62: #{tpu_custom_call.1} parent=59 // pred_check_branch
          %520 = sbr.rel (%p518) target = $region64
        $region63: #{tpu_custom_call.1} parent=59 // pred_region
          %s521 = sand.u32 %s142, 1
          %s522 = scalar_lea.sflag [#allocation4], %s521
          %s523 = sand.u32 %s142, 1
          %s524 = smul.addr %s523, 8
          %s525 = scalar_lea.vmem [#allocation8], %s524
          %526 = dma.done %s522, 128
        $region64: #{tpu_custom_call.1} parent=59 // pred_fallthru
          _
      $region60: #{tpu_custom_call.1} parent=5 // pred_fallthru
        _
    $region6: #{tpu_custom_call.1} parent=1 // loop_footer
      %s22 = sadd.s32 1, %s18
    $region7: #{tpu_custom_call.1} parent=1 // loop_footer_branch
      %17 = sbr.rel target = $region3
    $region8: #{tpu_custom_call.1} parent=1 // loop_exit
      _
    %527 = vsyncpa [#allocation3], 1
    %s528 = scalar_lea.sflag [#allocation3], 1
    %529 = vsyncpa %s528, 1
    %530 = vsyncpa [#allocation6], 1
    %531 = vsyncpa [#allocation4], 1
    %s532 = scalar_lea.sflag [#allocation4], 1
    %533 = vsyncpa %s532, 1

// kernel: tpu_custom_call.1
$region0: #{tpu_custom_call.1}
  #allocation0 [shape = 'u32[]', space=smem, size = 0x4, offset = 0x4, fixed_abs, tag = 'smem constant byte address 0x4 - core index']
  #allocation1 [shape = 'u32[144,128]{1,0:T(1,128)}', space=vmem, size = 0x12000, scoped, tag = 'internal scratch']
  %s0 = inlined_call_operand.hbm [shape: bf16[16,128], index: 0, kind: input, shape index: {}]
  %s1 = inlined_call_operand.hbm [shape: bf16[128,128], index: 1, kind: input, shape index: {}]
  %s2 = inlined_call_operand.vmem [shape: f32[1,128], index: 2, kind: input, shape index: {}]
  %s3 = inlined_call_operand.hbm [shape: bf16[128,128], index: 3, kind: input, shape index: {}]
  %s4 = inlined_call_operand.vmem [shape: f32[1,128], index: 4, kind: input, shape index: {}]
  %s5 = inlined_call_operand.hbm [shape: f32[16,128], index: 5, kind: output, shape index: {}]
  %s6 = sld [smem:[#allocation0]]
  $region65: #{tpu_custom_call.1} parent=0
    _
  %s8 = ssub.s32 1, %s6
  %s9 = scalar_select 0, %s8, %s6
  $region1: #{tpu_custom_call.1} parent=0
    #allocation2 [shape = 'u8[4096]{0}', space=vmem, size = 0x1000, scoped, tag = 'input window, operand 0']
    #allocation3 [shape = 's32[2]{0}', space=sflag, size = 0x8, scoped, tag = 'scoped memory for tpu_custom_call.1']
    #allocation4 [shape = 's32[2]{0}', space=sflag, size = 0x8, scoped, tag = 'scoped memory for tpu_custom_call.1']
    #allocation5 [shape = 'u8[32768]{0}', space=vmem, size = 0x8000, scoped, tag = 'input window, operand 1, single buffered']
    #allocation6 [shape = 's32[1]{0}', space=sflag, size = 0x4, scoped, tag = 'scoped memory for tpu_custom_call.1']
    #allocation7 [shape = 'u8[32768]{0}', space=vmem, size = 0x8000, scoped, tag = 'input window, operand 3, single buffered']
    #allocation8 [shape = 'u8[8192]{0}', space=vmem, size = 0x2000, scoped, tag = 'output window, operand 0']
    %10 = vsyncpa [#allocation3], 0
    %s11 = scalar_lea.sflag [#allocation3], 1
    %12 = vsyncpa %s11, 0
    %13 = vsyncpa [#allocation6], 0
    %14 = vsyncpa [#allocation4], 0
    %s15 = scalar_lea.sflag [#allocation4], 1
    %16 = vsyncpa %s15, 0
    loop: start=0, step=1, limit=4
    $region2: #{tpu_custom_call.1} parent=1 // loop_pre_header
      _
    $region3: #{tpu_custom_call.1} parent=1 // loop_header
      %s18 = sphi 0, %s22
      %p19 = scmp.ge.s32.totalorder %s18, 4
      %s28 = sphi 0, %s30
      %s31 = sphi 0, %s28
      %s32 = sphi 0, %s31
      %s48 = sphi 0, %s32
      %s52 = sphi 0, %s52
      %s54 = sphi 0, %s52
      %s55 = sphi 0, %s54
      %s69 = sphi 0, %s55
      %s73 = sphi 0, %s73
      %s75 = sphi 0, %s73
      %s76 = sphi 0, %s75
      %s90 = sphi 0, %s76
      %s94 = sphi 0, %s94
      %s96 = sphi 0, %s94
      %s97 = sphi 0, %s96
      %s111 = sphi 0, %s97
      %s115 = sphi 0, %s115
      %s117 = sphi 0, %s115
      %s118 = sphi 0, %s117
      %s132 = sphi 0, %s118
      %s138 = sphi 0, %s140
      %s141 = sphi 0, %s138
      %s142 = sphi 0, %s141
      %s158 = sphi 0, %s142
    $region4: #{tpu_custom_call.1} parent=1 // loop_header_branch
      %21 = sbr.rel (%p19) target = $region8
    $region5: #{tpu_custom_call.1} parent=1 // loop_body
      %s23 = ssub.s32 %s18, 1
      %s24 = ssub.s32 %s18, 2
      %s25 = sadd.s32 %s18, 1
      %s26 = ssub.s32 %s18, %s25
      %p27 = scmp.eq.s32.totalorder %s26, 0
      %s29 = sadd.s32 %s28, 1
      %s30 = scalar_select %p27, %s28, %s29
      %p33 = pneg %p27
      %p34 = scmp.eq.s32.totalorder %s18, 1
      %p35 = por %p33, %p34
      %p36 = scmp.ne.s32.totalorder %s28, %s31
      %p37 = scmp.eq.s32.totalorder %s18, 0
      %p38 = por %p36, %p37
      %p39 = scmp.ne.s32.totalorder %s28, %s31
      %p40 = scmp.eq.s32.totalorder %s23, 1
      %p41 = por %p39, %p40
      %p42 = scmp.ne.s32.totalorder %s31, %s32
      %p43 = scmp.eq.s32.totalorder %s23, 0
      %p44 = por %p42, %p43
      %p45 = scmp.ne.s32.totalorder %s31, %s32
      %p46 = scmp.eq.s32.totalorder %s24, 1
      %p47 = por %p45, %p46
      %p49 = scmp.ne.s32.totalorder %s32, %s48
      %p50 = scmp.eq.s32.totalorder %s24, 0
      %p51 = por %p49, %p50
      %s53 = sadd.s32 %s52, 1
      %p56 = scmp.eq.s32.totalorder %s18, 1
      %p57 = scmp.ne.s32.totalorder %s52, %s54
      %p58 = scmp.eq.s32.totalorder %s18, 0
      %p59 = por %p57, %p58
      %p60 = scmp.ne.s32.totalorder %s52, %s54
      %p61 = scmp.eq.s32.totalorder %s23, 1
      %p62 = por %p60, %p61
      %p63 = scmp.ne.s32.totalorder %s54, %s55
      %p64 = scmp.eq.s32.totalorder %s23, 0
      %p65 = por %p63, %p64
      %p66 = scmp.ne.s32.totalorder %s54, %s55
      %p67 = scmp.eq.s32.totalorder %s24, 1
      %p68 = por %p66, %p67
      %p70 = scmp.ne.s32.totalorder %s55, %s69
      %p71 = scmp.eq.s32.totalorder %s24, 0
      %p72 = por %p70, %p71
      %s74 = sadd.s32 %s73, 1
      %p77 = scmp.eq.s32.totalorder %s18, 1
      %p78 = scmp.ne.s32.totalorder %s73, %s75
      %p79 = scmp.eq.s32.totalorder %s18, 0
      %p80 = por %p78, %p79
      %p81 = scmp.ne.s32.totalorder %s73, %s75
      %p82 = scmp.eq.s32.totalorder %s23, 1
      %p83 = por %p81, %p82
      %p84 = scmp.ne.s32.totalorder %s75, %s76
      %p85 = scmp.eq.s32.totalorder %s23, 0
      %p86 = por %p84, %p85
      %p87 = scmp.ne.s32.totalorder %s75, %s76
      %p88 = scmp.eq.s32.totalorder %s24, 1
      %p89 = por %p87, %p88
      %p91 = scmp.ne.s32.totalorder %s76, %s90
      %p92 = scmp.eq.s32.totalorder %s24, 0
      %p93 = por %p91, %p92
      %s95 = sadd.s32 %s94, 1
      %p98 = scmp.eq.s32.totalorder %s18, 1
      %p99 = scmp.ne.s32.totalorder %s94, %s96
      %p100 = scmp.eq.s32.totalorder %s18, 0
      %p101 = por %p99, %p100
      %p102 = scmp.ne.s32.totalorder %s94, %s96
      %p103 = scmp.eq.s32.totalorder %s23, 1
      %p104 = por %p102, %p103
      %p105 = scmp.ne.s32.totalorder %s96, %s97
      %p106 = scmp.eq.s32.totalorder %s23, 0
      %p107 = por %p105, %p106
      %p108 = scmp.ne.s32.totalorder %s96, %s97
      %p109 = scmp.eq.s32.totalorder %s24, 1
      %p110 = por %p108, %p109
      %p112 = scmp.ne.s32.totalorder %s97, %s111
      %p113 = scmp.eq.s32.totalorder %s24, 0
      %p114 = por %p112, %p113
      %s116 = sadd.s32 %s115, 1
      %p119 = scmp.eq.s32.totalorder %s18, 1
      %p120 = scmp.ne.s32.totalorder %s115, %s117
      %p121 = scmp.eq.s32.totalorder %s18, 0
      %p122 = por %p120, %p121
      %p123 = scmp.ne.s32.totalorder %s115, %s117
      %p124 = scmp.eq.s32.totalorder %s23, 1
      %p125 = por %p123, %p124
      %p126 = scmp.ne.s32.totalorder %s117, %s118
      %p127 = scmp.eq.s32.totalorder %s23, 0
      %p128 = por %p126, %p127
      %p129 = scmp.ne.s32.totalorder %s117, %s118
      %p130 = scmp.eq.s32.totalorder %s24, 1
      %p131 = por %p129, %p130
      %p133 = scmp.ne.s32.totalorder %s118, %s132
      %p134 = scmp.eq.s32.totalorder %s24, 0
      %p135 = por %p133, %p134
      %s136 = ssub.s32 %s18, %s25
      %p137 = scmp.eq.s32.totalorder %s136, 0
      %s139 = sadd.s32 %s138, 1
      %s140 = scalar_select %p137, %s138, %s139
      %p143 = pneg %p137
      %p144 = scmp.eq.s32.totalorder %s18, 1
      %p145 = por %p143, %p144
      %p146 = scmp.ne.s32.totalorder %s138, %s141
      %p147 = scmp.eq.s32.totalorder %s18, 0
      %p148 = por %p146, %p147
      %p149 = scmp.ne.s32.totalorder %s138, %s141
      %p150 = scmp.eq.s32.totalorder %s23, 1
      %p151 = por %p149, %p150
      %p152 = scmp.ne.s32.totalorder %s141, %s142
      %p153 = scmp.eq.s32.totalorder %s23, 0
      %p154 = por %p152, %p153
      %p155 = scmp.ne.s32.totalorder %s141, %s142
      %p156 = scmp.eq.s32.totalorder %s24, 1
      %p157 = por %p155, %p156
      %p159 = scmp.ne.s32.totalorder %s142, %s158
      %p160 = scmp.eq.s32.totalorder %s24, 0
      %p161 = por %p159, %p160
      %p162 = scmp.le.s32.totalorder 1, %s18
      %p163 = scmp.lt.s32.totalorder %s18, 3
      %p164 = pnand %p162, %p163
      %p165 = pneg %p164
      // Predicated region
      $region9: #{tpu_custom_call.1} parent=5 // pred_check
        _
      $region10: #{tpu_custom_call.1} parent=5 // pred_check_branch
        %167 = sbr.rel (%p164) target = $region12
      $region11: #{tpu_custom_call.1} parent=5 // pred_region
        %s168 = ssub.s32 %s18, 1
        // Predicated region
        $region13: #{tpu_custom_call.1} parent=11 // pred_check
          %p169 = pneg %p65
        $region14: #{tpu_custom_call.1} parent=11 // pred_check_branch
          %171 = sbr.rel (%p169) target = $region16
        $region15: #{tpu_custom_call.1} parent=11 // pred_region
          %s173 = ssub.s32 1024, 1024
          %174 = vsyncadd [#allocation6], %s173
          %s175 = sshll.u32 [#allocation5], 4
          %s176 = int_to_ptr.vmem [resolvable:$true] %s175
          %181 = dma.hbm_to_vmem [thread:$0]  %s1, 1024, %s176, [#allocation6], 64, 64, 4
        $region16: #{tpu_custom_call.1} parent=11 // pred_fallthru
          _
        // Predicated region
        $region17: #{tpu_custom_call.1} parent=11 // pred_check
          %p182 = pneg %p86
        $region18: #{tpu_custom_call.1} parent=11 // pred_check_branch
          %184 = sbr.rel (%p182) target = $region20
        $region19: #{tpu_custom_call.1} parent=11 // pred_region
          _
        $region20: #{tpu_custom_call.1} parent=11 // pred_fallthru
          _
        // Predicated region
        $region21: #{tpu_custom_call.1} parent=11 // pred_check
          %p185 = pneg %p107
        $region22: #{tpu_custom_call.1} parent=11 // pred_check_branch
          %187 = sbr.rel (%p185) target = $region24
        $region23: #{tpu_custom_call.1} parent=11 // pred_region
          %s189 = ssub.s32 1024, 1024
          %190 = vsyncadd [#allocation6], %s189
          %s191 = sshll.u32 [#allocation7], 4
          %s192 = int_to_ptr.vmem [resolvable:$true] %s191
          %197 = dma.hbm_to_vmem [thread:$0]  %s3, 1024, %s192, [#allocation6], 64, 64, 4
        $region24: #{tpu_custom_call.1} parent=11 // pred_fallthru
          _
        // Predicated region
        $region25: #{tpu_custom_call.1} parent=11 // pred_check
          %p198 = pneg %p128
        $region26: #{tpu_custom_call.1} parent=11 // pred_check_branch
          %200 = sbr.rel (%p198) target = $region28
        $region27: #{tpu_custom_call.1} parent=11 // pred_region
          _
        $region28: #{tpu_custom_call.1} parent=11 // pred_fallthru
          _
      $region12: #{tpu_custom_call.1} parent=5 // pred_fallthru
        _
      %p201 = scmp.lt.s32.totalorder %s18, 2
      // Predicated region
      $region29: #{tpu_custom_call.1} parent=5 // pred_check
        %p202 = pneg %p201
      $region30: #{tpu_custom_call.1} parent=5 // pred_check_branch
        %204 = sbr.rel (%p202) target = $region32
      $region31: #{tpu_custom_call.1} parent=5 // pred_region
        // Predicated region
        $region33: #{tpu_custom_call.1} parent=31 // pred_check
          %p205 = pneg %p38
        $region34: #{tpu_custom_call.1} parent=31 // pred_check_branch
          %207 = sbr.rel (%p205) target = $region36
        $region35: #{tpu_custom_call.1} parent=31 // pred_region
          %s208 = sand.u32 %s28, 1
          %s209 = scalar_lea.sflag [#allocation3], %s208
          %s210 = sand.u32 %s28, 1
          %s211 = smul.addr %s210, 4
          %s212 = scalar_lea.vmem [#allocation2], %s211
          %s214 = ssub.s32 64, 64
          %215 = vsyncadd %s209, %s214
          %s216 = smul.addr %s18, 64
          %s217 = scalar_lea.hbm %s0, %s216
          %s219 = sshll.u32 %s212, 4
          %s220 = int_to_ptr.vmem [resolvable:$true] %s219
          %222 = dma.hbm_to_vmem [thread:$0]  %s217, 64, %s220, %s209
        $region36: #{tpu_custom_call.1} parent=31 // pred_fallthru
          _
      $region32: #{tpu_custom_call.1} parent=5 // pred_fallthru
        _
      %p223 = scmp.le.s32.totalorder 1, %s18
      %p224 = scmp.lt.s32.totalorder %s18, 3
      %p225 = pnand %p223, %p224
      %p226 = pneg %p225
      // Predicated region
      $region37: #{tpu_custom_call.1} parent=5 // pred_check
        _
      $region38: #{tpu_custom_call.1} parent=5 // pred_check_branch
        %228 = sbr.rel (%p225) target = $region40
      $region39: #{tpu_custom_call.1} parent=5 // pred_region
        %s229 = ssub.s32 %s18, 1
        %s230 = sand.u32 %s31, 1
        %s231 = scalar_lea.sflag [#allocation3], %s230
        %s232 = sand.u32 %s31, 1
        %s233 = smul.addr %s232, 4
        %s234 = scalar_lea.vmem [#allocation2], %s233
        // Predicated region
        $region41: #{tpu_custom_call.1} parent=39 // pred_check
          %p235 = pneg %p44
        $region42: #{tpu_custom_call.1} parent=39 // pred_check_branch
          %237 = sbr.rel (%p235) target = $region44
        $region43: #{tpu_custom_call.1} parent=39 // pred_region
          %238 = dma.done %s231, 64
        $region44: #{tpu_custom_call.1} parent=39 // pred_fallthru
          _
        // Predicated region
        $region45: #{tpu_custom_call.1} parent=39 // pred_check
          %p239 = pneg %p65
        $region46: #{tpu_custom_call.1} parent=39 // pred_check_branch
          %241 = sbr.rel (%p239) target = $region48
        $region47: #{tpu_custom_call.1} parent=39 // pred_region
          %242 = dma.done [#allocation6], 1024
        $region48: #{tpu_custom_call.1} parent=39 // pred_fallthru
          _
        // Predicated region
        $region49: #{tpu_custom_call.1} parent=39 // pred_check
          %p243 = pneg %p107
        $region50: #{tpu_custom_call.1} parent=39 // pred_check_branch
          %245 = sbr.rel (%p243) target = $region52
        $region51: #{tpu_custom_call.1} parent=39 // pred_region
          %246 = dma.done [#allocation6], 1024
        $region52: #{tpu_custom_call.1} parent=39 // pred_fallthru
          _
        %s247 = sand.u32 %s31, 1
        %s248 = scalar_lea.sflag [#allocation3], %s247
        %s249 = sand.u32 %s31, 1
        %s250 = smul.addr %s249, 4
        %s251 = scalar_lea.vmem [#allocation2], %s250
        %p252 = pneg %p44
        %p253 = pneg %p41
        %p254 = pneg %p65
        %p255 = pneg %p62
        %p256 = pneg %p86
        %p257 = pneg %p83
        %p258 = pneg %p107
        %p259 = pneg %p104
        %p260 = pneg %p128
        %p261 = pneg %p125
        %p262 = pneg %p154
        %p263 = pneg %p151
        %s264 = sand.u32 %s141, 1
        %s265 = scalar_lea.sflag [#allocation4], %s264
        %s266 = sand.u32 %s141, 1
        %s267 = smul.addr %s266, 8
        %s268 = scalar_lea.vmem [#allocation8], %s267
        %v270 = vld [vmem:[%s234] sm:$0xf]
        %v271 = vld [vmem:[#allocation5] sm:$0xf]
        %v272 = vld [vmem:[#allocation5 + $0x4] sm:$0xf]
        %v273 = vld [vmem:[#allocation5 + $0x8] sm:$0xf]
        %v274 = vld [vmem:[#allocation5 + $0xc] sm:$0xf]
        %v275 = vld [vmem:[#allocation5 + $0x10] sm:$0xf]
        %v276 = vld [vmem:[#allocation5 + $0x14] sm:$0xf]
        %v277 = vld [vmem:[#allocation5 + $0x18] sm:$0xf]
        %v278 = vld [vmem:[#allocation5 + $0x1c] sm:$0xf]
        %v279 = vld [vmem:[#allocation5 + $0x20] sm:$0xf]
        %v280 = vld [vmem:[#allocation5 + $0x24] sm:$0xf]
        %v281 = vld [vmem:[#allocation5 + $0x28] sm:$0xf]
        %v282 = vld [vmem:[#allocation5 + $0x2c] sm:$0xf]
        %v283 = vld [vmem:[#allocation5 + $0x30] sm:$0xf]
        %v284 = vld [vmem:[#allocation5 + $0x34] sm:$0xf]
        %v285 = vld [vmem:[#allocation5 + $0x38] sm:$0xf]
        %v286 = vld [vmem:[#allocation5 + $0x3c] sm:$0xf]
        %v287 = vld [vmem:[%s2] sm:$0x1]
        %v289 = vlaneseq
        %v290 = vshrl.u32 %v289, 7
        %v291 = vsub.s32 0, %v290
        %v292 = vrot.slane %v287, %v291
        %v310 = vunpack.c.l.b16 %v271
        %v311 = vunpack.c.l.b16 %v272
        %v312 = vunpack.c.l.b16 %v273
        %v313 = vunpack.c.l.b16 %v274
        %v314 = vunpack.c.l.b16 %v275
        %v315 = vunpack.c.l.b16 %v276
        %v316 = vunpack.c.l.b16 %v277
        %v317 = vunpack.c.l.b16 %v278
        %v318 = vunpack.c.l.b16 %v279
        %v319 = vunpack.c.l.b16 %v280
        %v320 = vunpack.c.l.b16 %v281
        %v321 = vunpack.c.l.b16 %v282
        %v322 = vunpack.c.l.b16 %v283
        %v323 = vunpack.c.l.b16 %v284
        %v324 = vunpack.c.l.b16 %v285
        %v325 = vunpack.c.l.b16 %v286
        %v326 = vpack.c.b16 %v311, %v310
        %v327 = vpack.c.b16 %v313, %v312
        %v328 = vpack.c.b16 %v315, %v314
        %v329 = vpack.c.b16 %v317, %v316
        %v330 = vpack.c.b16 %v319, %v318
        %v331 = vpack.c.b16 %v321, %v320
        %v332 = vpack.c.b16 %v323, %v322
        %v333 = vpack.c.b16 %v325, %v324
        %342 = vmatprep.subr.bf16.mxu0 0
        %343 = vmatpush1.bf16.msra.mxu0 %v326
        %344 = vmatprep.subr.bf16.mxu0 0
        %345 = vmatpush1.bf16.msra.mxu0 %v327
        %346 = vmatprep.subr.bf16.mxu0 0
        %347 = vmatpush1.bf16.msra.mxu0 %v328
        %348 = vmatprep.subr.bf16.mxu0 0
        %349 = vmatpush1.bf16.msra.mxu0 %v329
        %350 = vmatprep.subr.bf16.mxu0 0
        %351 = vmatpush1.bf16.msra.mxu0 %v330
        %352 = vmatprep.subr.bf16.mxu0 0
        %353 = vmatpush1.bf16.msra.mxu0 %v331
        %354 = vmatprep.subr.bf16.mxu0 0
        %355 = vmatpush1.bf16.msra.mxu0 %v332
        %356 = vmatprep.subr.bf16.mxu0 0
        %357 = vmatpush1.bf16.msra.mxu0 %v333
        %358 = vmatprep.subr.bf16.mxu0 0
        %359 = vmatpush1.bf16.msra.mxu0 0
        %360 = vmatprep.subr.bf16.mxu0 0
        %361 = vmatpush1.bf16.msra.mxu0 0
        %362 = vmatprep.subr.bf16.mxu0 0
        %363 = vmatpush1.bf16.msra.mxu0 0
        %364 = vmatprep.subr.bf16.mxu0 0
        %365 = vmatpush1.bf16.msra.mxu0 0
        %366 = vmatprep.subr.bf16.mxu0 0
        %367 = vmatpush1.bf16.msra.mxu0 0
        %368 = vmatprep.subr.bf16.mxu0 0
        %369 = vmatpush1.bf16.msra.mxu0 0
        %370 = vmatprep.subr.bf16.mxu0 0
        %371 = vmatpush1.bf16.msra.mxu0 0
        %372 = vmatprep.subr.bf16.mxu0 0
        %373 = vmatpush1.bf16.msra.mxu0 0
        %374 = vmatprep.mubr.bf16.mxu0 0
        %375 = vmatmul.mubr.bf16.gmra.mrb[0].mxu0 %v270
        %v376 = vpop.f32.mrb[0].mxu0
        %v377 = vadd.f32 %v292, %v376
        %v378 = vpop.f32.mrb[0].mxu0
        %v379 = vpop.f32.mrb[0].mxu0
        %v380 = vpop.f32.mrb[0].mxu0
        %381 = vdwg.mxu0
        %v382 = vpack.c.bf16 %v377, %v377
        %v383 = vld [vmem:[#allocation7] sm:$0xf]
        %v384 = vld [vmem:[#allocation7 + $0x4] sm:$0xf]
        %v385 = vld [vmem:[#allocation7 + $0x8] sm:$0xf]
        %v386 = vld [vmem:[#allocation7 + $0xc] sm:$0xf]
        %v387 = vld [vmem:[#allocation7 + $0x10] sm:$0xf]
        %v388 = vld [vmem:[#allocation7 + $0x14] sm:$0xf]
        %v389 = vld [vmem:[#allocation7 + $0x18] sm:$0xf]
        %v390 = vld [vmem:[#allocation7 + $0x1c] sm:$0xf]
        %v391 = vld [vmem:[#allocation7 + $0x20] sm:$0xf]
        %v392 = vld [vmem:[#allocation7 + $0x24] sm:$0xf]
        %v393 = vld [vmem:[#allocation7 + $0x28] sm:$0xf]
        %v394 = vld [vmem:[#allocation7 + $0x2c] sm:$0xf]
        %v395 = vld [vmem:[#allocation7 + $0x30] sm:$0xf]
        %v396 = vld [vmem:[#allocation7 + $0x34] sm:$0xf]
        %v397 = vld [vmem:[#allocation7 + $0x38] sm:$0xf]
        %v398 = vld [vmem:[#allocation7 + $0x3c] sm:$0xf]
        %v399 = vld [vmem:[%s4] sm:$0x1]
        %v401 = vlaneseq
        %v402 = vshrl.u32 %v401, 7
        %v403 = vsub.s32 0, %v402
        %v404 = vrot.slane %v399, %v403
        %v422 = vunpack.c.l.b16 %v383
        %v423 = vunpack.c.l.b16 %v384
        %v424 = vunpack.c.l.b16 %v385
        %v425 = vunpack.c.l.b16 %v386
        %v426 = vunpack.c.l.b16 %v387
        %v427 = vunpack.c.l.b16 %v388
        %v428 = vunpack.c.l.b16 %v389
        %v429 = vunpack.c.l.b16 %v390
        %v430 = vunpack.c.l.b16 %v391
        %v431 = vunpack.c.l.b16 %v392
        %v432 = vunpack.c.l.b16 %v393
        %v433 = vunpack.c.l.b16 %v394
        %v434 = vunpack.c.l.b16 %v395
        %v435 = vunpack.c.l.b16 %v396
        %v436 = vunpack.c.l.b16 %v397
        %v437 = vunpack.c.l.b16 %v398
        %v438 = vpack.c.b16 %v423, %v422
        %v439 = vpack.c.b16 %v425, %v424
        %v440 = vpack.c.b16 %v427, %v426
        %v441 = vpack.c.b16 %v429, %v428
        %v442 = vpack.c.b16 %v431, %v430
        %v443 = vpack.c.b16 %v433, %v432
        %v444 = vpack.c.b16 %v435, %v434
        %v445 = vpack.c.b16 %v437, %v436
        %454 = vmatprep.subr.bf16.mxu0 0
        %455 = vmatpush1.bf16.msra.mxu0 %v438
        %456 = vmatprep.subr.bf16.mxu0 0
        %457 = vmatpush1.bf16.msra.mxu0 %v439
        %458 = vmatprep.subr.bf16.mxu0 0
        %459 = vmatpush1.bf16.msra.mxu0 %v440
        %460 = vmatprep.subr.bf16.mxu0 0
        %461 = vmatpush1.bf16.msra.mxu0 %v441
        %462 = vmatprep.subr.bf16.mxu0 0
        %463 = vmatpush1.bf16.msra.mxu0 %v442
        %464 = vmatprep.subr.bf16.mxu0 0
        %465 = vmatpush1.bf16.msra.mxu0 %v443
        %466 = vmatprep.subr.bf16.mxu0 0
        %467 = vmatpush1.bf16.msra.mxu0 %v444
        %468 = vmatprep.subr.bf16.mxu0 0
        %469 = vmatpush1.bf16.msra.mxu0 %v445
        %470 = vmatprep.subr.bf16.mxu0 0
        %471 = vmatpush1.bf16.msra.mxu0 0
        %472 = vmatprep.subr.bf16.mxu0 0
        %473 = vmatpush1.bf16.msra.mxu0 0
        %474 = vmatprep.subr.bf16.mxu0 0
        %475 = vmatpush1.bf16.msra.mxu0 0
        %476 = vmatprep.subr.bf16.mxu0 0
        %477 = vmatpush1.bf16.msra.mxu0 0
        %478 = vmatprep.subr.bf16.mxu0 0
        %479 = vmatpush1.bf16.msra.mxu0 0
        %480 = vmatprep.subr.bf16.mxu0 0
        %481 = vmatpush1.bf16.msra.mxu0 0
        %482 = vmatprep.subr.bf16.mxu0 0
        %483 = vmatpush1.bf16.msra.mxu0 0
        %484 = vmatprep.subr.bf16.mxu0 0
        %485 = vmatpush1.bf16.msra.mxu0 0
        %486 = vmatprep.mubr.bf16.mxu0 0
        %487 = vmatmul.mubr.bf16.gmra.mrb[0].mxu0 %v382
        %v488 = vpop.f32.mrb[0].mxu0
        %v489 = vadd.f32 %v404, %v488
        %v490 = vpop.f32.mrb[0].mxu0
        %v491 = vpop.f32.mrb[0].mxu0
        %v492 = vpop.f32.mrb[0].mxu0
        %493 = vdwg.mxu0
        %494 = vst [vmem:[%s268] sm:$0xff] %v489
        %s495 = sand.u32 %s141, 1
        %s496 = scalar_lea.sflag [#allocation4], %s495
        %s497 = sand.u32 %s141, 1
        %s498 = smul.addr %s497, 8
        %s499 = scalar_lea.vmem [#allocation8], %s498
        // Predicated region
        $region53: #{tpu_custom_call.1} parent=39 // pred_check
          %p500 = pneg %p151
        $region54: #{tpu_custom_call.1} parent=39 // pred_check_branch
          %502 = sbr.rel (%p500) target = $region56
        $region55: #{tpu_custom_call.1} parent=39 // pred_region
          %s504 = ssub.s32 128, 128
          %505 = vsyncadd %s496, %s504
          %s506 = smul.addr %s23, 128
          %s507 = scalar_lea.hbm %s5, %s506
          %s509 = sshll.u32 %s499, 4
          %s510 = int_to_ptr.vmem [resolvable:$true] %s509
          %512 = dma.vmem_to_hbm [thread:$0]  %s510, 128, %s507, %s496
        $region56: #{tpu_custom_call.1} parent=39 // pred_fallthru
          _
      $region40: #{tpu_custom_call.1} parent=5 // pred_fallthru
        _
      %p513 = scmp.le.s32.totalorder 2, %s18
      // Predicated region
      $region57: #{tpu_custom_call.1} parent=5 // pred_check
        %p514 = pneg %p513
      $region58: #{tpu_custom_call.1} parent=5 // pred_check_branch
        %516 = sbr.rel (%p514) target = $region60
      $region59: #{tpu_custom_call.1} parent=5 // pred_region
        %s517 = ssub.s32 %s18, 2
        // Predicated region
        $region61: #{tpu_custom_call.1} parent=59 // pred_check
          %p518 = pneg %p157
        $region62: #{tpu_custom_call.1} parent=59 // pred_check_branch
          %520 = sbr.rel (%p518) target = $region64
        $region63: #{tpu_custom_call.1} parent=59 // pred_region
          %s521 = sand.u32 %s142, 1
          %s522 = scalar_lea.sflag [#allocation4], %s521
          %s523 = sand.u32 %s142, 1
          %s524 = smul.addr %s523, 8
          %s525 = scalar_lea.vmem [#allocation8], %s524
          %526 = dma.done %s522, 128
        $region64: #{tpu_custom_call.1} parent=59 // pred_fallthru
          _
      $region60: #{tpu_custom_call.1} parent=5 // pred_fallthru
        _
    $region6: #{tpu_custom_call.1} parent=1 // loop_footer
      %s22 = sadd.s32 1, %s18
    $region7: #{tpu_custom_call.1} parent=1 // loop_footer_branch
      %17 = sbr.rel target = $region3
    $region8: #{tpu_custom_call.1} parent=1 // loop_exit
      _
    %527 = vsyncpa [#allocation3], 1
    %s528 = scalar_lea.sflag [#allocation3], 1
    %529 = vsyncpa %s528, 1
    %530 = vsyncpa [#allocation6], 1
    %531 = vsyncpa [#allocation4], 1
    %s532 = scalar_lea.sflag [#allocation4], 1
    %533 = vsyncpa %s532, 1

</llo_original>
